<compile_context>
chip_gen: v5e
topology: v5e:2x2
jax: 0.10.0
libtpu: 0.0.40
codegen_flags: <defaults>
</compile_context>

<pallas_src>
import jax
import jax.numpy as jnp
from jax import lax
from jax.experimental import pallas as pl
from jax.experimental.pallas import tpu as pltpu

EOS_IND = 9
PAD_IND = 4367


# -------------------- Pallas kernel: streaming row logsumexp ----------------
def _row_lse_kernel(x_ref, o_ref, m_sc, l_sc):
    v_idx = pl.program_id(1)

    @pl.when(v_idx == 0)
    def _init():
        m_sc[...] = jnp.full(m_sc.shape, -jnp.inf, jnp.float32)
        l_sc[...] = jnp.zeros(l_sc.shape, jnp.float32)

    x = x_ref[...]                                           # (rt, vt) native dtype (bf16 OK)
    # --- online logsumexp over streamed V tiles (f32 accumulation) ---
    tile_max = jnp.max(x, axis=-1, keepdims=True).astype(jnp.float32)   # (rt, 1)
    m_prev = m_sc[...]
    m_new = jnp.maximum(m_prev, tile_max)
    # Guard: an all--inf row so far would give exp(-inf - (-inf)) = NaN.
    m_safe = jnp.where(m_new == -jnp.inf, jnp.float32(0.0), m_new)
    p = jnp.exp(x.astype(jnp.float32) - m_safe)              # cast fuses into the exp chain
    l_sc[...] = (l_sc[...] * jnp.exp(m_prev - m_safe)
                 + jnp.sum(p, axis=-1, keepdims=True))
    m_sc[...] = m_new

    @pl.when(v_idx == pl.num_programs(1) - 1)
    def _finalize():
        o_ref[...] = m_sc[...] + jnp.log(l_sc[...])          # (rt, 1)


# -------------------- tile derivation (VMEM-budget based) -------------------
def _pick_tile(dim, base, max_tile):
    """Largest multiple of `base` that divides `dim` and is <= max_tile.
    Falls back to the full dim when dim is not a multiple of base."""
    if dim % base != 0:
        return dim
    t = int(min(max(int(max_tile), base), dim))
    t = max((t // base) * base, base)
    while dim % t != 0:
        t -= base
    return t


def _derive_tiles(n_rows, vocab, itemsize, target_block_bytes):
    """Pick (row_tile, vocab_tile) for a (n_rows, vocab) streaming block.

    The block is (rt, vt) * itemsize bytes; we aim for ~target_block_bytes
    (1-4 MiB sweet spot), shrinking vt (multiples of 128) before rows when the
    budget is tight, and keep >= 2 row tiles when possible so the 'parallel'
    row axis can be sharded across v7x's two TensorCores.
    """
    # Vocab tile: keep the full vocab unless even a minimal 8-row slab blows
    # the budget (then split; vt must be a multiple of 128 dividing V).
    vt = vocab
    if vocab % 128 == 0 and 8 * vocab * itemsize > target_block_bytes:
        max_vt = max(target_block_bytes // (8 * itemsize), 128)
        vt = _pick_tile(vocab, 128, max_vt)
    # Row tile (sublane dim) from the remaining budget.
    max_rt = max(target_block_bytes // (vt * itemsize), 8)
    rt = _pick_tile(n_rows, 8, max_rt)
    # v7x has 2 TCs/chip: avoid collapsing to a single row tile.
    if n_rows // rt < 2 and n_rows % 8 == 0 and n_rows >= 16:
        rt = _pick_tile(n_rows, 8, n_rows // 2)
    return rt, vt


def _row_logsumexp(x2d, *, target_block_bytes):
    """lse[i] = logsumexp(x2d[i, :]) via a streaming Pallas kernel. Returns (N,) f32."""
    n_rows, vocab = x2d.shape
    itemsize = x2d.dtype.itemsize
    rt, vt = _derive_tiles(n_rows, vocab, itemsize, target_block_bytes)

    # Explicit scoped-VMEM budget: 2x double-buffered input block + one
    # block-sized f32 temp (exp chain) + (rt,1) scratch/output, plus headroom.
    # Defaults are only 16 MiB (v5e) / 32 MiB (v6e/v7x); physical VMEM is
    # 128 MiB on v5e/v6e but only 64 MiB/TC on v7x, so cap well under that.
    need = (2 * rt * vt * itemsize      # double-buffered logits block
            + rt * vt * 4               # f32 temp for the exp/sum chain
            + 2 * 2 * rt * 4            # m/l scratch
            + 2 * rt * 4)               # double-buffered (rt, 1) output block
    vmem_limit = int(min(max(need + (8 << 20), 32 << 20), 44 << 20))

    cost = pl.CostEstimate(
        flops=6 * n_rows * vocab,
        transcendentals=n_rows * vocab,
        bytes_accessed=n_rows * vocab * itemsize + n_rows * 4,
    )

    out = pl.pallas_call(
        _row_lse_kernel,
        out_shape=jax.ShapeDtypeStruct((n_rows, 1), jnp.float32),
        grid_spec=pltpu.PrefetchScalarGridSpec(
            num_scalar_prefetch=0,
            grid=(n_rows // rt, vocab // vt),
            in_specs=[pl.BlockSpec((rt, vt), lambda n, v: (n, v))],
            out_specs=pl.BlockSpec((rt, 1), lambda n, v: (n, 0)),
            scratch_shapes=[
                pltpu.VMEM((rt, 1), jnp.float32),   # running max
                pltpu.VMEM((rt, 1), jnp.float32),   # running sum-exp
            ],
        ),
        compiler_params=pltpu.CompilerParams(
            dimension_semantics=("parallel", "arbitrary"),
            vmem_limit_bytes=vmem_limit,
        ),
        cost_estimate=cost,
    )(x2d)
    return out[:, 0]


# -------------------- RewardCriterion (log_softmax fused via the kernel) ----
def reward_criterion(sample_logits, seq, reward, *, target_block_bytes=2 << 20):
    """RewardCriterion applied to log_softmax(sample_logits).

    sample_logits: (B, T, V) pre-softmax logits (native dtype; bf16 preferred --
                   the (B, T, V) stream is the only heavy HBM traffic).
    seq:           (B, T) sampled token ids.
    reward:        (B,) or (B, T) baseline-subtracted reward.
    Returns the scalar f32 loss of the torch RewardCriterion.

    The log-softmax denominator is computed by a streaming Pallas kernel over
    (B*T, V); block sizes are derived from `target_block_bytes` (default 2 MiB,
    double-buffered plus an f32 temp -> well inside v5e/v6e 128 MiB and v7x's
    64 MiB/TC VMEM).
    """
    B, T, V = sample_logits.shape
    seq = seq.astype(jnp.int32)
    if reward.ndim == 1:
        reward = reward[:, None]
    reward = jnp.broadcast_to(reward.astype(jnp.float32), (B, T))

    # Gather the logit of each sampled token in the wrapper: touches only B*T
    # elements of HBM and keeps the iota/compare/select + lane reduce out of
    # the V-streaming hot loop.
    # TODO(synk): out-of-range token ids clamp (JAX gather semantics); torch.gather would raise.
    picked_logit = jnp.take_along_axis(sample_logits, seq[..., None], axis=2)
    picked_logit = picked_logit[..., 0].astype(jnp.float32)          # (B, T)

    # Streaming log-softmax denominator (Pallas kernel) over flattened rows.
    lse = _row_logsumexp(sample_logits.reshape(B * T, V),
                         target_block_bytes=target_block_bytes).reshape(B, T)
    picked = picked_logit - lse                                       # log-prob of seq token

    # mask = shift-right of keep, leading 1  (torch: cat([ones(B,1), keep[:, :-1]], 1))
    keep = jnp.logical_and(seq != EOS_IND, seq != PAD_IND).astype(jnp.float32)
    mask = jnp.concatenate([jnp.ones((B, 1), jnp.float32), keep[:, :-1]], axis=1)

    loss = jnp.sum(-picked * reward * mask) / jnp.sum(mask)
    return loss.astype(jnp.float32)


# -------------------- deterministic synthetic "model" -----------------------
class TinySeqModel:
    """Stand-in for `self.model`: embeds src/tgt tokens and projects to vocab."""

    def __init__(self, vocab, hidden, key):
        k1, k2 = jax.random.split(key)
        self.embed = jax.random.normal(k1, (vocab, hidden), jnp.float32) * 0.1
        self.proj = jax.random.normal(k2, (hidden, vocab), jnp.float32) * 0.1

    def _logits(self, src, tgt):
        tgt_emb = self.embed[tgt]                                    # (B, T, H)
        src_ctx = jnp.mean(self.embed[src], axis=1, keepdims=True)   # (B, 1, H)
        # bf16 logits: halves bytes/element of the kernel's HBM stream; all
        # downstream accumulation stays in f32.
        return ((tgt_emb + src_ctx) @ self.proj).astype(jnp.bfloat16)  # (B, T, V)

    def _sample(self, src, tgt, sample_method="greedy", key=None):
        # TODO(synk): real model does autoregressive decoding; deterministic
        # single-shot stand-in.  Returns raw logits (not logprobs): log_softmax
        # is fused into the Pallas RewardCriterion path, so the (B,T,V)
        # logprobs tensor never round-trips HBM.
        logits = self._logits(src, tgt)
        if sample_method == "greedy":
            res = jnp.argmax(logits, axis=-1)
        else:
            res = jax.random.categorical(key, logits.astype(jnp.float32), axis=-1)
        return res.astype(jnp.int32), logits


def get_self_critical_reward_proxy(greedy_res, data_gts, gen_result):
    # TODO(synk): CIDEr scoring works on detokenized strings with a document
    # frequency table (no Pallas / array equivalent); replaced by a
    # deterministic token-overlap proxy with the same
    # (scores_sample - scores_greedy) structure, returned as (B,).
    def score(res):
        match = (res[:, :, None, None] == data_gts[:, None, :, :]).any(axis=(2, 3))
        return match.astype(jnp.float32).mean(axis=1)                # (B,)

    return score(gen_result) - score(greedy_res)                     # (B,)


def scst_loss(model, src, tgt, gts, key, *, target_block_bytes=2 << 20):
    # greedy baseline (no-grad in torch; plain forward here)
    greedy_res, _ = model._sample(src, tgt, sample_method="greedy")
    # sampled rollout + logits (log_softmax handled by the Pallas path)
    gen_result, sample_logits = model._sample(src, tgt, sample_method="sample", key=key)
    # self-critical reward (baseline-subtracted)
    reward = get_self_critical_reward_proxy(greedy_res, gts, gen_result)
    # RewardCriterion -- Pallas-backed
    return reward_criterion(sample_logits, gen_result, reward,
                            target_block_bytes=target_block_bytes)


# -------------------- pure-JAX reference (for the correctness check) --------
def _reference_loss(logits, seq, reward_b):
    logprobs = jax.nn.log_softmax(logits.astype(jnp.float32), axis=-1)
    picked = jnp.take_along_axis(logprobs, seq[..., None].astype(jnp.int32),
                                 axis=2)[..., 0]
    keep = ((seq != EOS_IND) & (seq != PAD_IND)).astype(jnp.float32)
    mask = jnp.concatenate(
        [jnp.ones((seq.shape[0], 1), jnp.float32), keep[:, :-1]], axis=1)
    rw = jnp.broadcast_to(reward_b[:, None].astype(jnp.float32), seq.shape)
    return jnp.sum(-picked * rw * mask) / jnp.sum(mask)


if __name__ == "__main__":
    B, T, V, H = 16, 8, 512, 32
    key = jax.random.PRNGKey(0)
    k_model, k_src, k_tgt, k_gts, k_sample = jax.random.split(key, 5)

    model = TinySeqModel(V, H, k_model)
    src = jax.random.randint(k_src, (B, T), 0, V, dtype=jnp.int32)
    tgt = jax.random.randint(k_tgt, (B, T), 0, V, dtype=jnp.int32)
    gts = jax.random.randint(k_gts, (B, 2, T), 0, V, dtype=jnp.int32)  # (B, n_refs, T_gt)

    # Tiny block budget so the toy exercises both grid axes and V streaming:
    # (rt, vt) = (8, 256) -> grid = (16, 2).
    loss = scst_loss(model, src, tgt, gts, k_sample, target_block_bytes=4096)
    jax.block_until_ready(loss)
    assert loss.shape == () and loss.dtype == jnp.float32

    # cross-check against a pure-JAX RewardCriterion (log_softmax + gather + mask)
    greedy_res, _ = model._sample(src, tgt, sample_method="greedy")
    gen_result, sample_logits = model._sample(src, tgt, sample_method="sample",
                                              key=k_sample)
    reward = get_self_critical_reward_proxy(greedy_res, gts, gen_result)
    ref = _reference_loss(sample_logits, gen_result, reward)
    assert jnp.abs(loss - ref) <= 1e-4 * (1.0 + jnp.abs(ref)), (float(loss), float(ref))

    # also with the default budget-derived tiles (single V tile, 2 row tiles)
    loss2 = reward_criterion(sample_logits, gen_result, reward)
    jax.block_until_ready(loss2)
    assert jnp.abs(loss2 - ref) <= 1e-4 * (1.0 + jnp.abs(ref)), (float(loss2), float(ref))

    print("KERNEL_OK")
</pallas_src>

<mosaic_0001>
module attributes {stable_mosaic.version = 11 : i64} {
  func.func @_row_lse_kernel(%arg0: i32, %arg1: i32, %arg2: memref<8x256xbf16, #tpu.memory_space<vmem>>, %arg3: memref<8x1xf32, #tpu.memory_space<vmem>>, %arg4: memref<8x1xf32, #tpu.memory_space<vmem>>, %arg5: memref<8x1xf32, #tpu.memory_space<vmem>>) attributes {dimension_semantics = [#tpu.dimension_semantics<parallel>, #tpu.dimension_semantics<arbitrary>], iteration_bounds = array<i64: 16, 2>, scalar_prefetch = 0 : i64, scratch_operands = 2 : i64, tpu.core_type = #tpu.core_type<tc>, window_params = [{transform_indices = @transform_0, window_bounds = array<i64: 8, 256>}, {transform_indices = @transform_1, window_bounds = array<i64: 8, 1>}]} {
    %c0_i32 = arith.constant 0 : i32
    %0 = arith.cmpi eq, %arg1, %c0_i32 : i32
    %1 = arith.extui %0 : i1 to i32
    %c0_i32_0 = arith.constant 0 : i32
    %2 = arith.cmpi ne, %1, %c0_i32_0 : i32
    scf.if %2 {
      %cst_14 = arith.constant 0xFF800000 : f32
      %29 = vector.broadcast %cst_14 : f32 to vector<8x1xf32>
      %c0_15 = arith.constant 0 : index
      %c0_16 = arith.constant 0 : index
      %30 = vector.load %arg4[%c0_15, %c0_16] : memref<8x1xf32, #tpu.memory_space<vmem>>, vector<8x1xf32>
      tpu.vector_store %arg4[%c0_15, %c0_16], %29 {strides = array<i32>} : memref<8x1xf32, #tpu.memory_space<vmem>>, vector<8x1xf32>,
      %cst_17 = arith.constant 0.000000e+00 : f32
      %31 = vector.broadcast %cst_17 : f32 to vector<8x1xf32>
      %c0_18 = arith.constant 0 : index
      %c0_19 = arith.constant 0 : index
      %32 = vector.load %arg5[%c0_18, %c0_19] : memref<8x1xf32, #tpu.memory_space<vmem>>, vector<8x1xf32>
      tpu.vector_store %arg5[%c0_18, %c0_19], %31 {strides = array<i32>} : memref<8x1xf32, #tpu.memory_space<vmem>>, vector<8x1xf32>,
    } else {
    }
    %c0 = arith.constant 0 : index
    %c0_1 = arith.constant 0 : index
    %3 = vector.load %arg2[%c0, %c0_1] : memref<8x256xbf16, #tpu.memory_space<vmem>>, vector<8x256xbf16>
    %cst = arith.constant dense<0xFF80> : vector<8xbf16>
    %4 = vector.multi_reduction <maximumf>, %3, %cst [1] : vector<8x256xbf16> to vector<8xbf16>
    %5 = vector.shape_cast %4 : vector<8xbf16> to vector<8x1xbf16>
    %6 = arith.extf %5 : vector<8x1xbf16> to vector<8x1xf32>
    %c0_2 = arith.constant 0 : index
    %c0_3 = arith.constant 0 : index
    %7 = vector.load %arg4[%c0_2, %c0_3] : memref<8x1xf32, #tpu.memory_space<vmem>>, vector<8x1xf32>
    %8 = arith.maximumf %7, %6 : vector<8x1xf32>
    %cst_4 = arith.constant 0xFF800000 : f32
    %9 = vector.broadcast %cst_4 : f32 to vector<8x1xf32>
    %10 = arith.cmpf oeq, %8, %9 : vector<8x1xf32>
    %cst_5 = arith.constant 0.000000e+00 : f32
    %11 = vector.broadcast %cst_5 : f32 to vector<8x1xf32>
    %12 = arith.select %10, %11, %8 : vector<8x1xi1>, vector<8x1xf32>
    %13 = arith.extf %3 : vector<8x256xbf16> to vector<8x256xf32>
    %14 = vector.broadcast %12 : vector<8x1xf32> to vector<8x256xf32>
    %15 = arith.subf %13, %14 : vector<8x256xf32>
    %16 = math.exp %15 : vector<8x256xf32>
    %c0_6 = arith.constant 0 : index
    %c0_7 = arith.constant 0 : index
    %17 = vector.load %arg5[%c0_6, %c0_7] : memref<8x1xf32, #tpu.memory_space<vmem>>, vector<8x1xf32>
    %18 = arith.subf %7, %12 : vector<8x1xf32>
    %19 = math.exp %18 : vector<8x1xf32>
    %20 = arith.mulf %17, %19 : vector<8x1xf32>
    %cst_8 = arith.constant dense<0.000000e+00> : vector<8xf32>
    %21 = vector.multi_reduction <add>, %16, %cst_8 [1] : vector<8x256xf32> to vector<8xf32>
    %22 = vector.shape_cast %21 : vector<8xf32> to vector<8x1xf32>
    %23 = arith.addf %20, %22 : vector<8x1xf32>
    %c0_9 = arith.constant 0 : index
    %c0_10 = arith.constant 0 : index
    %24 = vector.load %arg5[%c0_9, %c0_10] : memref<8x1xf32, #tpu.memory_space<vmem>>, vector<8x1xf32>
    tpu.vector_store %arg5[%c0_9, %c0_10], %23 {strides = array<i32>} : memref<8x1xf32, #tpu.memory_space<vmem>>, vector<8x1xf32>,
    %c0_11 = arith.constant 0 : index
    %c0_12 = arith.constant 0 : index
    %25 = vector.load %arg4[%c0_11, %c0_12] : memref<8x1xf32, #tpu.memory_space<vmem>>, vector<8x1xf32>
    tpu.vector_store %arg4[%c0_11, %c0_12], %8 {strides = array<i32>} : memref<8x1xf32, #tpu.memory_space<vmem>>, vector<8x1xf32>,
    %c1_i32 = arith.constant 1 : i32
    %26 = arith.cmpi eq, %arg1, %c1_i32 : i32
    %27 = arith.extui %26 : i1 to i32
    %c0_i32_13 = arith.constant 0 : i32
    %28 = arith.cmpi ne, %27, %c0_i32_13 : i32
    scf.if %28 {
      %c0_14 = arith.constant 0 : index
      %c0_15 = arith.constant 0 : index
      %29 = vector.load %arg4[%c0_14, %c0_15] : memref<8x1xf32, #tpu.memory_space<vmem>>, vector<8x1xf32>
      %c0_16 = arith.constant 0 : index
      %c0_17 = arith.constant 0 : index
      %30 = vector.load %arg5[%c0_16, %c0_17] : memref<8x1xf32, #tpu.memory_space<vmem>>, vector<8x1xf32>
      %31 = math.log %30 : vector<8x1xf32>
      %32 = arith.addf %29, %31 : vector<8x1xf32>
      %c0_18 = arith.constant 0 : index
      %c0_19 = arith.constant 0 : index
      %33 = vector.load %arg3[%c0_18, %c0_19] : memref<8x1xf32, #tpu.memory_space<vmem>>, vector<8x1xf32>
      tpu.vector_store %arg3[%c0_18, %c0_19], %32 {strides = array<i32>} : memref<8x1xf32, #tpu.memory_space<vmem>>, vector<8x1xf32>,
    } else {
    }
    return
  }
  func.func @transform_0(%arg0: i32, %arg1: i32) -> (i32, i32) {
    %c0_i32 = arith.constant 0 : i32
    return %arg0, %arg1 : i32, i32
  }
  func.func @transform_1(%arg0: i32, %arg1: i32) -> (i32, i32) {
    %c0_i32 = arith.constant 0 : i32
    %c0_i32_0 = arith.constant 0 : i32
    return %arg0, %c0_i32 : i32, i32
  }
}

</mosaic_0001>

<llo_original>
// kernel: tpu_custom_call.1
$region0: #{tpu_custom_call.1}
  #allocation0 [shape = 'u32[]', space=smem, size = 0x4, offset = 0x4, fixed_abs, tag = 'smem constant byte address 0x4 - core index']
  #allocation1 [shape = 'u32[72,128]{1,0:T(1,128)}', space=vmem, size = 0x9000, scoped, tag = 'internal scratch']
  #allocation2 [shape = 'f32[8,1]{1,0:T(8,128)}', space=vmem, size = 0x1000, scoped, tag = 'scratch operand']
  #allocation3 [shape = 'f32[8,1]{1,0:T(8,128)}', space=vmem, size = 0x1000, scoped, tag = 'scratch operand']
  %s0 = inlined_call_operand.hbm [shape: bf16[128,512], index: 0, kind: input, shape index: {}]
  %s1 = inlined_call_operand.vmem [shape: f32[128,1], index: 1, kind: output, shape index: {}]
  %s2 = sld [smem:[#allocation0]]
  $region49: #{tpu_custom_call.1} parent=0
    _
  %s4 = ssub.s32 1, %s2
  %s5 = scalar_select 0, %s4, %s2
  $region1: #{tpu_custom_call.1} parent=0
    #allocation4 [shape = 'u8[8192]{0}', space=vmem, size = 0x2000, scoped, tag = 'input window, operand 0']
    #allocation5 [shape = 's32[2]{0}', space=sflag, size = 0x8, scoped, tag = 'scoped memory for tpu_custom_call.1']
    %6 = vsyncpa [#allocation5], 0
    %s7 = scalar_lea.sflag [#allocation5], 1
    %8 = vsyncpa %s7, 0
    loop: start=0, step=1, limit=34
    $region2: #{tpu_custom_call.1} parent=1 // loop_pre_header
      _
    $region3: #{tpu_custom_call.1} parent=1 // loop_header
      %s10 = sphi 0, %s14
      %p11 = scmp.ge.s32.totalorder %s10, 34
      %s17 = sphi 0, %s29
      %s18 = sphi 0, %s25
      %s19 = sphi 0, %s17
      %s20 = sphi 0, %s18
      %s21 = sphi 0, %s19
      %s22 = sphi 0, %s20
      %s34 = sphi 0, %s36
      %s37 = sphi 0, %s34
      %s38 = sphi 0, %s37
      %s54 = sphi 0, %s38
      %s60 = sphi 0, %s62
      %s63 = sphi 0, %s60
      %s64 = sphi 0, %s63
      %s80 = sphi 0, %s64
    $region4: #{tpu_custom_call.1} parent=1 // loop_header_branch
      %13 = sbr.rel (%p11) target = $region8
    $region5: #{tpu_custom_call.1} parent=1 // loop_body
      %s15 = ssub.s32 %s10, 1
      %s16 = ssub.s32 %s10, 2
      %s23 = sadd.s32 1, %s18
      %p24 = scmp.ge.s32.totalorder %s23, 2
      %s25 = scalar_select %p24, 0, %s23
      %s26 = sadd.s32 1, %s17
      %s27 = scalar_select %p24, %s26, %s17
      %p28 = scmp.ge.s32.totalorder %s27, 16
      %s29 = scalar_select %p28, 0, %s27
      %s30 = ssub.s32 %s17, %s29
      %s31 = ssub.s32 %s18, %s25
      %s32 = sor.u32 %s30, %s31
      %p33 = scmp.eq.s32.totalorder %s32, 0
      %s35 = sadd.s32 %s34, 1
      %s36 = scalar_select %p33, %s34, %s35
      %p39 = pneg %p33
      %p40 = scmp.eq.s32.totalorder %s10, 31
      %p41 = por %p39, %p40
      %p42 = scmp.ne.s32.totalorder %s34, %s37
      %p43 = scmp.eq.s32.totalorder %s10, 0
      %p44 = por %p42, %p43
      %p45 = scmp.ne.s32.totalorder %s34, %s37
      %p46 = scmp.eq.s32.totalorder %s15, 31
      %p47 = por %p45, %p46
      %p48 = scmp.ne.s32.totalorder %s37, %s38
      %p49 = scmp.eq.s32.totalorder %s15, 0
      %p50 = por %p48, %p49
      %p51 = scmp.ne.s32.totalorder %s37, %s38
      %p52 = scmp.eq.s32.totalorder %s16, 31
      %p53 = por %p51, %p52
      %p55 = scmp.ne.s32.totalorder %s38, %s54
      %p56 = scmp.eq.s32.totalorder %s16, 0
      %p57 = por %p55, %p56
      %s58 = ssub.s32 %s17, %s29
      %p59 = scmp.eq.s32.totalorder %s58, 0
      %s61 = sadd.s32 %s60, 1
      %s62 = scalar_select %p59, %s60, %s61
      %p65 = pneg %p59
      %p66 = scmp.eq.s32.totalorder %s10, 31
      %p67 = por %p65, %p66
      %p68 = scmp.ne.s32.totalorder %s60, %s63
      %p69 = scmp.eq.s32.totalorder %s10, 0
      %p70 = por %p68, %p69
      %p71 = scmp.ne.s32.totalorder %s60, %s63
      %p72 = scmp.eq.s32.totalorder %s15, 31
      %p73 = por %p71, %p72
      %p74 = scmp.ne.s32.totalorder %s63, %s64
      %p75 = scmp.eq.s32.totalorder %s15, 0
      %p76 = por %p74, %p75
      %p77 = scmp.ne.s32.totalorder %s63, %s64
      %p78 = scmp.eq.s32.totalorder %s16, 31
      %p79 = por %p77, %p78
      %p81 = scmp.ne.s32.totalorder %s64, %s80
      %p82 = scmp.eq.s32.totalorder %s16, 0
      %p83 = por %p81, %p82
      %p84 = scmp.le.s32.totalorder 1, %s10
      %p85 = scmp.lt.s32.totalorder %s10, 33
      %p86 = pnand %p84, %p85
      %p87 = pneg %p86
      // Predicated region
      $region9: #{tpu_custom_call.1} parent=5 // pred_check
        _
      $region10: #{tpu_custom_call.1} parent=5 // pred_check_branch
        %89 = sbr.rel (%p86) target = $region12
      $region11: #{tpu_custom_call.1} parent=5 // pred_region
        %s90 = ssub.s32 %s10, 1
      $region12: #{tpu_custom_call.1} parent=5 // pred_fallthru
        _
      %p91 = scmp.lt.s32.totalorder %s10, 32
      // Predicated region
      $region13: #{tpu_custom_call.1} parent=5 // pred_check
        %p92 = pneg %p91
      $region14: #{tpu_custom_call.1} parent=5 // pred_check_branch
        %94 = sbr.rel (%p92) target = $region16
      $region15: #{tpu_custom_call.1} parent=5 // pred_region
        // Predicated region
        $region17: #{tpu_custom_call.1} parent=15 // pred_check
          %p95 = pneg %p44
        $region18: #{tpu_custom_call.1} parent=15 // pred_check_branch
          %97 = sbr.rel (%p95) target = $region20
        $region19: #{tpu_custom_call.1} parent=15 // pred_region
          %s98 = sand.u32 %s34, 1
          %s99 = scalar_lea.sflag [#allocation5], %s98
          %s100 = sand.u32 %s34, 1
          %s101 = smul.addr %s100, 8
          %s102 = scalar_lea.vmem [#allocation4], %s101
          %s103 = smul.u32 2, %s18
          %105 = vsyncadd %s99, 0
          %s106 = smul.addr %s17, 4
          %s107 = sadd.s32 %s103, %s106
          %s108 = smul.addr %s107, 4
          %s109 = scalar_lea.hbm %s0, %s108
          %s111 = sshll.u32 %s109, 4
          %s112 = int_to_ptr.hbm [resolvable:$true] %s111
          %s113 = sshll.u32 %s102, 4
          %s114 = int_to_ptr.vmem [resolvable:$true] %s113
          %116 = dma.hbm_to_vmem [thread:$0]  %s112, 128, %s114, %s99
        $region20: #{tpu_custom_call.1} parent=15 // pred_fallthru
          _
      $region16: #{tpu_custom_call.1} parent=5 // pred_fallthru
        _
      %p117 = scmp.le.s32.totalorder 1, %s10
      %p118 = scmp.lt.s32.totalorder %s10, 33
      %p119 = pnand %p117, %p118
      %p120 = pneg %p119
      // Predicated region
      $region21: #{tpu_custom_call.1} parent=5 // pred_check
        _
      $region22: #{tpu_custom_call.1} parent=5 // pred_check_branch
        %122 = sbr.rel (%p119) target = $region24
      $region23: #{tpu_custom_call.1} parent=5 // pred_region
        %s123 = ssub.s32 %s10, 1
        %s124 = sand.u32 %s37, 1
        %s125 = scalar_lea.sflag [#allocation5], %s124
        %s126 = sand.u32 %s37, 1
        %s127 = smul.addr %s126, 8
        %s128 = scalar_lea.vmem [#allocation4], %s127
        // Predicated region
        $region25: #{tpu_custom_call.1} parent=23 // pred_check
          %p129 = pneg %p50
        $region26: #{tpu_custom_call.1} parent=23 // pred_check_branch
          %131 = sbr.rel (%p129) target = $region28
        $region27: #{tpu_custom_call.1} parent=23 // pred_region
          %133 = dma.done %s125, 128
        $region28: #{tpu_custom_call.1} parent=23 // pred_fallthru
          _
        %s134 = sand.u32 %s37, 1
        %s135 = scalar_lea.sflag [#allocation5], %s134
        %s136 = sand.u32 %s37, 1
        %s137 = smul.addr %s136, 8
        %s138 = scalar_lea.vmem [#allocation4], %s137
        %p139 = pneg %p50
        %p140 = pneg %p47
        %p141 = pneg %p76
        %p142 = pneg %p73
        %p143 = scmp.lt.s32.totalorder %s19, 15
        %s144 = scalar_select %p143, %s19, 15
        %s145 = smul.addr %s144, 8
        %s146 = scalar_lea.vmem %s1, %s145
        %s147 = smul.u32 2, %s20
        %p148 = scmp.lt.s32.totalorder %s19, 15
        %s149 = scalar_select %p148, %s19, 15
        %s150 = smul.addr %s149, 8
        %s151 = scalar_lea.vmem %s1, %s150
        %p152 = scmp.eq.s32.totalorder %s20, 0
        // Predicated region
        $region29: #{tpu_custom_call.1} parent=23 // pred_check
          %p153 = pneg %p152
        $region30: #{tpu_custom_call.1} parent=23 // pred_check_branch
          %155 = sbr.rel (%p153) target = $region32
        $region31: #{tpu_custom_call.1} parent=23 // pred_region
          %vm156 = vcmask 7168
          %157 = vst.msk [vmem:[#allocation2] sm:$0xff] %vm156, -inf
          %158 = vst.msk [vmem:[#allocation3] sm:$0xff] %vm156, 0.0
        $region32: #{tpu_custom_call.1} parent=23 // pred_fallthru
          _
        %v159 = vld [vmem:[%s128] sm:$0xff]
        %v160 = vunpack.c.l.bf16 %v159
        %v161 = vunpack.c.h.bf16 %v159
        %v162 = vmax.f32 %v160, %v161
        %163 = vmax.xlane.f32.xlu0 %v162
        %v164 = vpop.xlane.xlu0 %163
        %v165 = vpack.c.bf16 %v164, %v164
        %v166 = vunpack.c.l.bf16 %v165
        %v167 = vld [vmem:[#allocation2] sm:$0xff]
        %v168 = vmax.f32 %v167, %v166
        %vm169 = vcmp.eq.f32.partialorder %v168, -inf
        %v170 = vsel %vm169, 0.0, %v168
        %172 = vset.pattern.permute.xlu0 0
        %173 = vperm.xlu0 %172, %v170
        %v174 = vpop.permute.xlu0 %173
        %v176 = vsub.f32 %v160, %v174
        %v177 = vsub.f32 %v161, %v174
        %v178 = vmul.f32 %v176, 1.442695
        %v179 = vpow.pop %v178
        %v180 = vmul.f32 %v177, 1.442695
        %v181 = vpow.pop %v180
        %v182 = vld [vmem:[#allocation3] sm:$0xff]
        %v183 = vsub.f32 %v167, %v170
        %v184 = vmul.f32 %v183, 1.442695
        %v185 = vpow.pop %v184
        %v186 = vmul.f32 %v182, %v185
        %v187 = vadd.f32 %v179, %v181
        %188 = vadd.xlane.f32.xlu0 %v187
        %v189 = vpop.xlane.xlu0 %188
        %v190 = vadd.f32 %v186, %v189
        %vm191 = vcmask 7168
        %192 = vst.msk [vmem:[#allocation3] sm:$0xff] %vm191, %v190
        %193 = vst.msk [vmem:[#allocation2] sm:$0xff] %vm191, %v168
        %p194 = scmp.eq.s32.totalorder %s20, 1
        // Predicated region
        $region33: #{tpu_custom_call.1} parent=23 // pred_check
          %p195 = pneg %p194
        $region34: #{tpu_custom_call.1} parent=23 // pred_check_branch
          %197 = sbr.rel (%p195) target = $region36
        $region35: #{tpu_custom_call.1} parent=23 // pred_region
          %v198 = vld [vmem:[#allocation2] sm:$0xff]
          %v199 = vld [vmem:[#allocation3] sm:$0xff]
          %v200 = vlog2.pop %v199
          %v201 = vmul.f32 %v200, 0.6931472
          %v202 = vadd.f32 %v198, %v201
          %203 = vst.msk [vmem:[%s151] sm:$0xff] %vm191, %v202
        $region36: #{tpu_custom_call.1} parent=23 // pred_fallthru
          _
        %p204 = scmp.lt.s32.totalorder %s19, 15
        %s205 = scalar_select %p204, %s19, 15
        %s206 = smul.addr %s205, 8
        %s207 = scalar_lea.vmem %s1, %s206
        // Predicated region
        $region37: #{tpu_custom_call.1} parent=23 // pred_check
          %p208 = pneg %p73
        $region38: #{tpu_custom_call.1} parent=23 // pred_check_branch
          %210 = sbr.rel (%p208) target = $region40
        $region39: #{tpu_custom_call.1} parent=23 // pred_region
          _
        $region40: #{tpu_custom_call.1} parent=23 // pred_fallthru
          _
      $region24: #{tpu_custom_call.1} parent=5 // pred_fallthru
        _
      %p211 = scmp.le.s32.totalorder 2, %s10
      // Predicated region
      $region41: #{tpu_custom_call.1} parent=5 // pred_check
        %p212 = pneg %p211
      $region42: #{tpu_custom_call.1} parent=5 // pred_check_branch
        %214 = sbr.rel (%p212) target = $region44
      $region43: #{tpu_custom_call.1} parent=5 // pred_region
        %s215 = ssub.s32 %s10, 2
        // Predicated region
        $region45: #{tpu_custom_call.1} parent=43 // pred_check
          %p216 = pneg %p79
        $region46: #{tpu_custom_call.1} parent=43 // pred_check_branch
          %218 = sbr.rel (%p216) target = $region48
        $region47: #{tpu_custom_call.1} parent=43 // pred_region
          %p219 = scmp.lt.s32.totalorder %s21, 15
          %s220 = scalar_select %p219, %s21, 15
          %s221 = smul.addr %s220, 8
          %s222 = scalar_lea.vmem %s1, %s221
        $region48: #{tpu_custom_call.1} parent=43 // pred_fallthru
          _
      $region44: #{tpu_custom_call.1} parent=5 // pred_fallthru
        _
    $region6: #{tpu_custom_call.1} parent=1 // loop_footer
      %s14 = sadd.s32 1, %s10
    $region7: #{tpu_custom_call.1} parent=1 // loop_footer_branch
      %9 = sbr.rel target = $region3
    $region8: #{tpu_custom_call.1} parent=1 // loop_exit
      _
    %223 = vsyncpa [#allocation5], 1
    %s224 = scalar_lea.sflag [#allocation5], 1
    %225 = vsyncpa %s224, 1

</llo_original>
